<compile_context>
chip_gen: v6e
topology: v6e:2x2x1
jax: 0.10.0
libtpu: 0.0.40
codegen_flags: <defaults>
</compile_context>

<pallas_src>
import math

import jax
import jax.numpy as jnp
from jax.experimental import pallas as pl
from jax.experimental.pallas import tpu as pltpu


def _adaptation_mlp_kernel(x_ref, s1_ref, s2_ref, s3_ref,
                           w1_ref, w2_ref, w3_ref, o_ref):
    # x_ref : (1, tm, D)   row tile (channels-last), native dtype
    # sK_ref: (1, 1, H|D)  per-batch shift (writer-code term + bias), f32
    # wK_ref: (D|H, H|D)   feature part of layer-K weight (in, out)
    x = x_ref[0]                       # (tm, D)
    wdt = w1_ref.dtype                 # compute dtype of the matmuls

    # Layer 1: Linear + ReLU   (cat(x, wc) @ W1 == x @ W1[:D] + shift1)
    h = jnp.dot(x.astype(wdt), w1_ref[...], preferred_element_type=jnp.float32)
    h = jnp.maximum(h + s1_ref[0], 0.0)
    # Layer 2: Linear + ReLU
    h = jnp.dot(h.astype(wdt), w2_ref[...], preferred_element_type=jnp.float32)
    h = jnp.maximum(h + s2_ref[0], 0.0)
    # Layer 3: Linear (no ReLU) + residual (residual kept in f32)
    y = jnp.dot(h.astype(wdt), w3_ref[...], preferred_element_type=jnp.float32)
    y = y + s3_ref[0] + x.astype(jnp.float32)

    o_ref[0] = y.astype(o_ref.dtype)


def _round_up(x: int, m: int) -> int:
    return ((x + m - 1) // m) * m


def _vmem_capacity_bytes() -> int:
    try:
        return int(pltpu.get_tpu_info().vmem_capacity_bytes)
    except Exception:
        return 64 << 20  # conservative fallback (v7x per-TensorCore VMEM)


def _row_tile_and_vmem(r: int, d: int, h: int, x_bytes: int, w_bytes: int,
                       max_rows: int):
    """Pick the row tile from a computed VMEM footprint and return
    (tile_rows, vmem_limit_bytes)."""
    weights = (d * h + h * h + h * d) * w_bytes     # single-buffered (Buffered(1))
    shifts = 2 * (h + h + d) * 4                    # double-buffered, tiny

    def footprint(tm):
        io_tiles = 2 * 2 * tm * d * x_bytes         # x + out tiles, double-buffered
        interm = 2 * tm * h * 4                     # f32 hidden activations
        return weights + shifts + io_tiles + interm

    capacity = _vmem_capacity_bytes()
    budget = capacity // 3                          # leave headroom for compiler scratch
    tm = _round_up(max(min(max_rows, r), 1), 8)
    while tm > 8 and footprint(tm) > budget:
        tm = _round_up(max(tm // 2, 8), 8)

    vmem_cap = min(64 << 20, capacity)
    vmem_limit = int(min(max(footprint(tm) * 5 // 4 + (2 << 20), 32 << 20), vmem_cap))
    return tm, vmem_limit


def adaptation_mlp(features, writer_code, w1, b1, w2, b2, w3, b3,
                   compute_dtype=None, max_tile_rows: int = 1024):
    """features: (N, d_model, *spatial); writer_code: (N, code_size).
    Weights are channels-last (in_features, out_features):
      w1: (d_model+code, H), w2: (H+code, H), w3: (H+code, d_model).
    Returns (N, d_model, *spatial) with the dtype of `features`."""
    n, d_model = features.shape[0], features.shape[1]
    spatial = features.shape[2:]
    r = math.prod(spatial) if spatial else 1
    h_dim = w1.shape[-1]

    # Channels-last flat layout: (N, R, D).
    x3d = jnp.moveaxis(features, 1, -1).reshape(n, r, d_model)

    # Split the concatenated-input weights (feature part / writer-code part) and
    # fold writer-code contribution + bias into per-batch shifts, computed once
    # here instead of per grid step inside the kernel.
    w1f, w1c = w1[:d_model], w1[d_model:]
    w2f, w2c = w2[:h_dim], w2[h_dim:]
    w3f, w3c = w3[:h_dim], w3[h_dim:]
    wc = writer_code.astype(jnp.float32)
    s1 = (wc @ w1c.astype(jnp.float32) + b1.astype(jnp.float32)).reshape(n, 1, h_dim)
    s2 = (wc @ w2c.astype(jnp.float32) + b2.astype(jnp.float32)).reshape(n, 1, h_dim)
    s3 = (wc @ w3c.astype(jnp.float32) + b3.astype(jnp.float32)).reshape(n, 1, d_model)

    if compute_dtype is not None:
        w1f = w1f.astype(compute_dtype)
        w2f = w2f.astype(compute_dtype)
        w3f = w3f.astype(compute_dtype)

    x_bytes = jnp.dtype(features.dtype).itemsize
    w_bytes = jnp.dtype(w1f.dtype).itemsize
    tm, vmem_limit = _row_tile_and_vmem(r, d_model, h_dim, x_bytes, w_bytes,
                                        max_tile_rows)

    # cdiv grid with zero-padded rows (padding sliced off below).
    n_row_tiles = pl.cdiv(r, tm)
    r_pad = n_row_tiles * tm
    if r_pad != r:
        x3d = jnp.pad(x3d, ((0, 0), (0, r_pad - r), (0, 0)))

    grid = (n, n_row_tiles)
    const = lambda i, j: (0, 0)
    per_batch = lambda i, j: (i, 0, 0)

    out3d = pl.pallas_call(
        _adaptation_mlp_kernel,
        out_shape=jax.ShapeDtypeStruct((n, r_pad, d_model), features.dtype),
        grid_spec=pltpu.PrefetchScalarGridSpec(
            num_scalar_prefetch=0,
            grid=grid,
            in_specs=[
                pl.BlockSpec((1, tm, d_model), lambda i, j: (i, j, 0)),
                pl.BlockSpec((1, 1, h_dim), per_batch),
                pl.BlockSpec((1, 1, h_dim), per_batch),
                pl.BlockSpec((1, 1, d_model), per_batch),
                pl.BlockSpec(w1f.shape, const, pipeline_mode=pl.Buffered(1)),
                pl.BlockSpec(w2f.shape, const, pipeline_mode=pl.Buffered(1)),
                pl.BlockSpec(w3f.shape, const, pipeline_mode=pl.Buffered(1)),
            ],
            out_specs=pl.BlockSpec((1, tm, d_model), lambda i, j: (i, j, 0)),
        ),
        compiler_params=pltpu.CompilerParams(
            dimension_semantics=("parallel", "parallel"),
            vmem_limit_bytes=vmem_limit),
    )(x3d, s1, s2, s3, w1f, w2f, w3f)

    out = out3d[:, :r, :].reshape((n,) + spatial + (d_model,))
    return jnp.moveaxis(out, -1, 1)


def _reference(features, writer_code, w1, b1, w2, b2, w3, b3):
    # Pure-JAX replica of AdaptationMLP.forward.
    f = jnp.moveaxis(features, 1, -1).astype(jnp.float32)
    wc = writer_code.astype(jnp.float32)
    extra = f.ndim - wc.ndim
    wc = wc.reshape(wc.shape[:1] + (1,) * extra + wc.shape[1:])
    wc = jnp.broadcast_to(wc, f.shape[:-1] + (writer_code.shape[-1],))
    res = f
    res = jnp.maximum(jnp.concatenate([res, wc], -1) @ w1 + b1, 0.0)
    res = jnp.maximum(jnp.concatenate([res, wc], -1) @ w2 + b2, 0.0)
    res = jnp.concatenate([res, wc], -1) @ w3 + b3
    return jnp.moveaxis(res + f, -1, 1).astype(features.dtype)


if __name__ == "__main__":
    key = jax.random.PRNGKey(0)
    ks = jax.random.split(key, 10)

    # Small shapes consistent with the module contract:
    #   features (N, d_model, H, W), writer_code (N, code_size)
    N, D, C, H = 2, 32, 8, 64

    def init_linear(kw, kb, fan_in, fan_out):
        bound = 1.0 / math.sqrt(fan_in)
        w = jax.random.uniform(kw, (fan_in, fan_out), jnp.float32, -bound, bound)
        b = jax.random.uniform(kb, (fan_out,), jnp.float32, -bound, bound)
        return w, b

    w1, b1 = init_linear(ks[2], ks[3], D + C, H)   # Linear(d_model+code, hidden)
    w2, b2 = init_linear(ks[4], ks[5], H + C, H)   # Linear(hidden+code, hidden)
    w3, b3 = init_linear(ks[6], ks[7], H + C, D)   # Linear(hidden+code, d_model)

    writer_code = jax.random.normal(ks[1], (N, C), dtype=jnp.float32)

    # Two spatial extents: one tile-aligned, one exercising the cdiv/padding path.
    for fkey, spatial in ((ks[8], (4, 16)), (ks[9], (3, 5))):
        features = jax.random.normal(fkey, (N, D) + spatial, dtype=jnp.float32)
        out = adaptation_mlp(features, writer_code, w1, b1, w2, b2, w3, b3)
        out = jax.block_until_ready(out)

        ref = _reference(features, writer_code, w1, b1, w2, b2, w3, b3)
        assert out.shape == features.shape and out.dtype == features.dtype
        max_err = float(jnp.max(jnp.abs(out.astype(jnp.float32) -
                                        ref.astype(jnp.float32))))
        assert jnp.allclose(out, ref, atol=2e-3, rtol=2e-3), (spatial, max_err)

    print("KERNEL_OK")
</pallas_src>

<mosaic_0001>
module attributes {stable_mosaic.version = 11 : i64} {
  func.func @_adaptation_mlp_kernel(%arg0: i32, %arg1: i32, %arg2: memref<1x64x32xf32, #tpu.memory_space<vmem>>, %arg3: memref<1x1x64xf32, #tpu.memory_space<vmem>>, %arg4: memref<1x1x64xf32, #tpu.memory_space<vmem>>, %arg5: memref<1x1x32xf32, #tpu.memory_space<vmem>>, %arg6: memref<32x64xf32, #tpu.memory_space<vmem>>, %arg7: memref<64x64xf32, #tpu.memory_space<vmem>>, %arg8: memref<64x32xf32, #tpu.memory_space<vmem>>, %arg9: memref<1x64x32xf32, #tpu.memory_space<vmem>>) attributes {dimension_semantics = [#tpu.dimension_semantics<parallel>, #tpu.dimension_semantics<parallel>], iteration_bounds = array<i64: 2, 1>, scalar_prefetch = 0 : i64, scratch_operands = 0 : i64, tpu.core_type = #tpu.core_type<tc>, window_params = [{transform_indices = @transform_0, window_bounds = array<i64: 1, 64, 32>}, {transform_indices = @transform_1, window_bounds = array<i64: 1, 1, 64>}, {transform_indices = @transform_2, window_bounds = array<i64: 1, 1, 64>}, {transform_indices = @transform_3, window_bounds = array<i64: 1, 1, 32>}, {pipeline_mode = #tpu.pipeline_mode<synchronous>, transform_indices = @transform_4, window_bounds = array<i64: 32, 64>}, {pipeline_mode = #tpu.pipeline_mode<synchronous>, transform_indices = @transform_5, window_bounds = array<i64: 64, 64>}, {pipeline_mode = #tpu.pipeline_mode<synchronous>, transform_indices = @transform_6, window_bounds = array<i64: 64, 32>}, {transform_indices = @transform_7, window_bounds = array<i64: 1, 64, 32>}]} {
    %c0 = arith.constant 0 : index
    %c0_0 = arith.constant 0 : index
    %c0_1 = arith.constant 0 : index
    %0 = vector.load %arg2[%c0, %c0_0, %c0_1] : memref<1x64x32xf32, #tpu.memory_space<vmem>>, vector<1x64x32xf32>
    %1 = vector.shape_cast %0 : vector<1x64x32xf32> to vector<64x32xf32>
    %c0_2 = arith.constant 0 : index
    %c0_3 = arith.constant 0 : index
    %2 = vector.load %arg6[%c0_2, %c0_3] : memref<32x64xf32, #tpu.memory_space<vmem>>, vector<32x64xf32>
    %cst = arith.constant dense<0.000000e+00> : vector<64x64xf32>
    %3 = tpu.matmul %1, %2, %cst {dimension_numbers = #tpu.dot_dimension_numbers<[1], [0], [0], [1], [0, 0, 1, 1], [], []>} : vector<64x32xf32>, vector<32x64xf32>, vector<64x64xf32> -> vector<64x64xf32>
    %c0_4 = arith.constant 0 : index
    %c0_5 = arith.constant 0 : index
    %c0_6 = arith.constant 0 : index
    %4 = vector.load %arg3[%c0_4, %c0_5, %c0_6] : memref<1x1x64xf32, #tpu.memory_space<vmem>>, vector<1x1x64xf32>
    %5 = vector.shape_cast %4 : vector<1x1x64xf32> to vector<1x64xf32>
    %6 = vector.broadcast %5 : vector<1x64xf32> to vector<64x64xf32>
    %7 = arith.addf %3, %6 : vector<64x64xf32>
    %cst_7 = arith.constant 0.000000e+00 : f32
    %8 = vector.broadcast %cst_7 : f32 to vector<64x64xf32>
    %9 = arith.maximumf %7, %8 : vector<64x64xf32>
    %c0_8 = arith.constant 0 : index
    %c0_9 = arith.constant 0 : index
    %10 = vector.load %arg7[%c0_8, %c0_9] : memref<64x64xf32, #tpu.memory_space<vmem>>, vector<64x64xf32>
    %cst_10 = arith.constant dense<0.000000e+00> : vector<64x64xf32>
    %11 = tpu.matmul %9, %10, %cst_10 {dimension_numbers = #tpu.dot_dimension_numbers<[1], [0], [0], [1], [0, 0, 1, 1], [], []>} : vector<64x64xf32>, vector<64x64xf32>, vector<64x64xf32> -> vector<64x64xf32>
    %c0_11 = arith.constant 0 : index
    %c0_12 = arith.constant 0 : index
    %c0_13 = arith.constant 0 : index
    %12 = vector.load %arg4[%c0_11, %c0_12, %c0_13] : memref<1x1x64xf32, #tpu.memory_space<vmem>>, vector<1x1x64xf32>
    %13 = vector.shape_cast %12 : vector<1x1x64xf32> to vector<1x64xf32>
    %14 = vector.broadcast %13 : vector<1x64xf32> to vector<64x64xf32>
    %15 = arith.addf %11, %14 : vector<64x64xf32>
    %cst_14 = arith.constant 0.000000e+00 : f32
    %16 = vector.broadcast %cst_14 : f32 to vector<64x64xf32>
    %17 = arith.maximumf %15, %16 : vector<64x64xf32>
    %c0_15 = arith.constant 0 : index
    %c0_16 = arith.constant 0 : index
    %18 = vector.load %arg8[%c0_15, %c0_16] : memref<64x32xf32, #tpu.memory_space<vmem>>, vector<64x32xf32>
    %cst_17 = arith.constant dense<0.000000e+00> : vector<64x32xf32>
    %19 = tpu.matmul %17, %18, %cst_17 {dimension_numbers = #tpu.dot_dimension_numbers<[1], [0], [0], [1], [0, 0, 1, 1], [], []>} : vector<64x64xf32>, vector<64x32xf32>, vector<64x32xf32> -> vector<64x32xf32>
    %c0_18 = arith.constant 0 : index
    %c0_19 = arith.constant 0 : index
    %c0_20 = arith.constant 0 : index
    %20 = vector.load %arg5[%c0_18, %c0_19, %c0_20] : memref<1x1x32xf32, #tpu.memory_space<vmem>>, vector<1x1x32xf32>
    %21 = vector.shape_cast %20 : vector<1x1x32xf32> to vector<1x32xf32>
    %22 = vector.broadcast %21 : vector<1x32xf32> to vector<64x32xf32>
    %23 = arith.addf %19, %22 : vector<64x32xf32>
    %24 = arith.addf %23, %1 : vector<64x32xf32>
    %c0_21 = arith.constant 0 : index
    %c0_22 = arith.constant 0 : index
    %c0_23 = arith.constant 0 : index
    %25 = vector.load %arg9[%c0_21, %c0_22, %c0_23] : memref<1x64x32xf32, #tpu.memory_space<vmem>>, vector<1x64x32xf32>
    %26 = vector.shape_cast %25 : vector<1x64x32xf32> to vector<64x32xf32>
    %27 = vector.shape_cast %24 : vector<64x32xf32> to vector<1x64x32xf32>
    tpu.vector_store %arg9[%c0_21, %c0_22, %c0_23], %27 {strides = array<i32>} : memref<1x64x32xf32, #tpu.memory_space<vmem>>, vector<1x64x32xf32>,
    return
  }
  func.func @transform_0(%arg0: i32, %arg1: i32) -> (i32, i32, i32) {
    %c0_i32 = arith.constant 0 : i32
    %c0_i32_0 = arith.constant 0 : i32
    return %arg0, %arg1, %c0_i32 : i32, i32, i32
  }
  func.func @transform_1(%arg0: i32, %arg1: i32) -> (i32, i32, i32) {
    %c0_i32 = arith.constant 0 : i32
    %c0_i32_0 = arith.constant 0 : i32
    %c0_i32_1 = arith.constant 0 : i32
    return %arg0, %c0_i32, %c0_i32_0 : i32, i32, i32
  }
  func.func @transform_2(%arg0: i32, %arg1: i32) -> (i32, i32, i32) {
    %c0_i32 = arith.constant 0 : i32
    %c0_i32_0 = arith.constant 0 : i32
    %c0_i32_1 = arith.constant 0 : i32
    return %arg0, %c0_i32, %c0_i32_0 : i32, i32, i32
  }
  func.func @transform_3(%arg0: i32, %arg1: i32) -> (i32, i32, i32) {
    %c0_i32 = arith.constant 0 : i32
    %c0_i32_0 = arith.constant 0 : i32
    %c0_i32_1 = arith.constant 0 : i32
    return %arg0, %c0_i32, %c0_i32_0 : i32, i32, i32
  }
  func.func @transform_4(%arg0: i32, %arg1: i32) -> (i32, i32) {
    %c0_i32 = arith.constant 0 : i32
    %c0_i32_0 = arith.constant 0 : i32
    %c0_i32_1 = arith.constant 0 : i32
    return %c0_i32, %c0_i32_0 : i32, i32
  }
  func.func @transform_5(%arg0: i32, %arg1: i32) -> (i32, i32) {
    %c0_i32 = arith.constant 0 : i32
    %c0_i32_0 = arith.constant 0 : i32
    %c0_i32_1 = arith.constant 0 : i32
    return %c0_i32, %c0_i32_0 : i32, i32
  }
  func.func @transform_6(%arg0: i32, %arg1: i32) -> (i32, i32) {
    %c0_i32 = arith.constant 0 : i32
    %c0_i32_0 = arith.constant 0 : i32
    %c0_i32_1 = arith.constant 0 : i32
    return %c0_i32, %c0_i32_0 : i32, i32
  }
  func.func @transform_7(%arg0: i32, %arg1: i32) -> (i32, i32, i32) {
    %c0_i32 = arith.constant 0 : i32
    %c0_i32_0 = arith.constant 0 : i32
    return %arg0, %arg1, %c0_i32 : i32, i32, i32
  }
}

</mosaic_0001>

<llo_original>
// kernel: tpu_custom_call.1
$region0: #{tpu_custom_call.1}
  #allocation0 [shape = 'u32[]', space=smem, size = 0x4, offset = 0x4, fixed_abs, tag = 'smem constant byte address 0x4 - core index']
  #allocation1 [shape = 'u32[144,128]{1,0:T(1,128)}', space=vmem, size = 0x12000, scoped, tag = 'internal scratch']
  %s0 = inlined_call_operand.vmem [shape: f32[2,64,32], index: 0, kind: input, shape index: {}]
  %s1 = inlined_call_operand.vmem [shape: f32[2,1,64], index: 1, kind: input, shape index: {}]
  %s2 = inlined_call_operand.vmem [shape: f32[2,1,64], index: 2, kind: input, shape index: {}]
  %s3 = inlined_call_operand.vmem [shape: f32[2,1,32], index: 3, kind: input, shape index: {}]
  %s4 = inlined_call_operand.vmem [shape: f32[32,64], index: 4, kind: input, shape index: {}]
  %s5 = inlined_call_operand.vmem [shape: f32[64,64], index: 5, kind: input, shape index: {}]
  %s6 = inlined_call_operand.vmem [shape: f32[64,32], index: 6, kind: input, shape index: {}]
  %s7 = inlined_call_operand.vmem [shape: f32[2,64,32], index: 7, kind: output, shape index: {}]
  %s8 = sld [smem:[#allocation0]]
  $region61: #{tpu_custom_call.1} parent=0
    _
  %s10 = ssub.s32 1, %s8
  %s11 = scalar_select 0, %s10, %s8
  loop: start=0, step=1, limit=4
  $region2: #{tpu_custom_call.1} parent=0 // loop_pre_header
    _
  $region3: #{tpu_custom_call.1} parent=0 // loop_header
    %s13 = sphi 0, %s17
    %p14 = scmp.ge.s32.totalorder %s13, 4
    %s20 = sphi 0, %s32
    %s21 = sphi 0, %s28
    %s22 = sphi 0, %s20
    %s23 = sphi 0, %s21
    %s24 = sphi 0, %s22
    %s25 = sphi 0, %s23
    %s37 = sphi 0, %s39
    %s40 = sphi 0, %s37
    %s41 = sphi 0, %s40
    %s57 = sphi 0, %s41
    %s63 = sphi 0, %s65
    %s66 = sphi 0, %s63
    %s67 = sphi 0, %s66
    %s83 = sphi 0, %s67
    %s89 = sphi 0, %s91
    %s92 = sphi 0, %s89
    %s93 = sphi 0, %s92
    %s109 = sphi 0, %s93
    %s115 = sphi 0, %s117
    %s118 = sphi 0, %s115
    %s119 = sphi 0, %s118
    %s135 = sphi 0, %s119
    %s139 = sphi 0, %s139
    %s141 = sphi 0, %s139
    %s142 = sphi 0, %s141
    %s156 = sphi 0, %s142
    %s160 = sphi 0, %s160
    %s162 = sphi 0, %s160
    %s163 = sphi 0, %s162
    %s177 = sphi 0, %s163
    %s181 = sphi 0, %s181
    %s183 = sphi 0, %s181
    %s184 = sphi 0, %s183
    %s198 = sphi 0, %s184
    %s206 = sphi 0, %s208
    %s209 = sphi 0, %s206
    %s210 = sphi 0, %s209
    %s226 = sphi 0, %s210
  $region4: #{tpu_custom_call.1} parent=0 // loop_header_branch
    %16 = sbr.rel (%p14) target = $region8
  $region5: #{tpu_custom_call.1} parent=0 // loop_body
    %s18 = ssub.s32 %s13, 1
    %s19 = ssub.s32 %s13, 2
    %s26 = sadd.s32 1, %s21
    %p27 = scmp.ge.s32.totalorder %s26, 1
    %s28 = scalar_select %p27, 0, %s26
    %s29 = sadd.s32 1, %s20
    %s30 = scalar_select %p27, %s29, %s20
    %p31 = scmp.ge.s32.totalorder %s30, 2
    %s32 = scalar_select %p31, 0, %s30
    %s33 = ssub.s32 %s20, %s32
    %s34 = ssub.s32 %s21, %s28
    %s35 = sor.u32 %s33, %s34
    %p36 = scmp.eq.s32.totalorder %s35, 0
    %s38 = sadd.s32 %s37, 1
    %s39 = scalar_select %p36, %s37, %s38
    %p42 = pneg %p36
    %p43 = scmp.eq.s32.totalorder %s13, 1
    %p44 = por %p42, %p43
    %p45 = scmp.ne.s32.totalorder %s37, %s40
    %p46 = scmp.eq.s32.totalorder %s13, 0
    %p47 = por %p45, %p46
    %p48 = scmp.ne.s32.totalorder %s37, %s40
    %p49 = scmp.eq.s32.totalorder %s18, 1
    %p50 = por %p48, %p49
    %p51 = scmp.ne.s32.totalorder %s40, %s41
    %p52 = scmp.eq.s32.totalorder %s18, 0
    %p53 = por %p51, %p52
    %p54 = scmp.ne.s32.totalorder %s40, %s41
    %p55 = scmp.eq.s32.totalorder %s19, 1
    %p56 = por %p54, %p55
    %p58 = scmp.ne.s32.totalorder %s41, %s57
    %p59 = scmp.eq.s32.totalorder %s19, 0
    %p60 = por %p58, %p59
    %s61 = ssub.s32 %s20, %s32
    %p62 = scmp.eq.s32.totalorder %s61, 0
    %s64 = sadd.s32 %s63, 1
    %s65 = scalar_select %p62, %s63, %s64
    %p68 = pneg %p62
    %p69 = scmp.eq.s32.totalorder %s13, 1
    %p70 = por %p68, %p69
    %p71 = scmp.ne.s32.totalorder %s63, %s66
    %p72 = scmp.eq.s32.totalorder %s13, 0
    %p73 = por %p71, %p72
    %p74 = scmp.ne.s32.totalorder %s63, %s66
    %p75 = scmp.eq.s32.totalorder %s18, 1
    %p76 = por %p74, %p75
    %p77 = scmp.ne.s32.totalorder %s66, %s67
    %p78 = scmp.eq.s32.totalorder %s18, 0
    %p79 = por %p77, %p78
    %p80 = scmp.ne.s32.totalorder %s66, %s67
    %p81 = scmp.eq.s32.totalorder %s19, 1
    %p82 = por %p80, %p81
    %p84 = scmp.ne.s32.totalorder %s67, %s83
    %p85 = scmp.eq.s32.totalorder %s19, 0
    %p86 = por %p84, %p85
    %s87 = ssub.s32 %s20, %s32
    %p88 = scmp.eq.s32.totalorder %s87, 0
    %s90 = sadd.s32 %s89, 1
    %s91 = scalar_select %p88, %s89, %s90
    %p94 = pneg %p88
    %p95 = scmp.eq.s32.totalorder %s13, 1
    %p96 = por %p94, %p95
    %p97 = scmp.ne.s32.totalorder %s89, %s92
    %p98 = scmp.eq.s32.totalorder %s13, 0
    %p99 = por %p97, %p98
    %p100 = scmp.ne.s32.totalorder %s89, %s92
    %p101 = scmp.eq.s32.totalorder %s18, 1
    %p102 = por %p100, %p101
    %p103 = scmp.ne.s32.totalorder %s92, %s93
    %p104 = scmp.eq.s32.totalorder %s18, 0
    %p105 = por %p103, %p104
    %p106 = scmp.ne.s32.totalorder %s92, %s93
    %p107 = scmp.eq.s32.totalorder %s19, 1
    %p108 = por %p106, %p107
    %p110 = scmp.ne.s32.totalorder %s93, %s109
    %p111 = scmp.eq.s32.totalorder %s19, 0
    %p112 = por %p110, %p111
    %s113 = ssub.s32 %s20, %s32
    %p114 = scmp.eq.s32.totalorder %s113, 0
    %s116 = sadd.s32 %s115, 1
    %s117 = scalar_select %p114, %s115, %s116
    %p120 = pneg %p114
    %p121 = scmp.eq.s32.totalorder %s13, 1
    %p122 = por %p120, %p121
    %p123 = scmp.ne.s32.totalorder %s115, %s118
    %p124 = scmp.eq.s32.totalorder %s13, 0
    %p125 = por %p123, %p124
    %p126 = scmp.ne.s32.totalorder %s115, %s118
    %p127 = scmp.eq.s32.totalorder %s18, 1
    %p128 = por %p126, %p127
    %p129 = scmp.ne.s32.totalorder %s118, %s119
    %p130 = scmp.eq.s32.totalorder %s18, 0
    %p131 = por %p129, %p130
    %p132 = scmp.ne.s32.totalorder %s118, %s119
    %p133 = scmp.eq.s32.totalorder %s19, 1
    %p134 = por %p132, %p133
    %p136 = scmp.ne.s32.totalorder %s119, %s135
    %p137 = scmp.eq.s32.totalorder %s19, 0
    %p138 = por %p136, %p137
    %s140 = sadd.s32 %s139, 1
    %p143 = scmp.eq.s32.totalorder %s13, 1
    %p144 = scmp.ne.s32.totalorder %s139, %s141
    %p145 = scmp.eq.s32.totalorder %s13, 0
    %p146 = por %p144, %p145
    %p147 = scmp.ne.s32.totalorder %s139, %s141
    %p148 = scmp.eq.s32.totalorder %s18, 1
    %p149 = por %p147, %p148
    %p150 = scmp.ne.s32.totalorder %s141, %s142
    %p151 = scmp.eq.s32.totalorder %s18, 0
    %p152 = por %p150, %p151
    %p153 = scmp.ne.s32.totalorder %s141, %s142
    %p154 = scmp.eq.s32.totalorder %s19, 1
    %p155 = por %p153, %p154
    %p157 = scmp.ne.s32.totalorder %s142, %s156
    %p158 = scmp.eq.s32.totalorder %s19, 0
    %p159 = por %p157, %p158
    %s161 = sadd.s32 %s160, 1
    %p164 = scmp.eq.s32.totalorder %s13, 1
    %p165 = scmp.ne.s32.totalorder %s160, %s162
    %p166 = scmp.eq.s32.totalorder %s13, 0
    %p167 = por %p165, %p166
    %p168 = scmp.ne.s32.totalorder %s160, %s162
    %p169 = scmp.eq.s32.totalorder %s18, 1
    %p170 = por %p168, %p169
    %p171 = scmp.ne.s32.totalorder %s162, %s163
    %p172 = scmp.eq.s32.totalorder %s18, 0
    %p173 = por %p171, %p172
    %p174 = scmp.ne.s32.totalorder %s162, %s163
    %p175 = scmp.eq.s32.totalorder %s19, 1
    %p176 = por %p174, %p175
    %p178 = scmp.ne.s32.totalorder %s163, %s177
    %p179 = scmp.eq.s32.totalorder %s19, 0
    %p180 = por %p178, %p179
    %s182 = sadd.s32 %s181, 1
    %p185 = scmp.eq.s32.totalorder %s13, 1
    %p186 = scmp.ne.s32.totalorder %s181, %s183
    %p187 = scmp.eq.s32.totalorder %s13, 0
    %p188 = por %p186, %p187
    %p189 = scmp.ne.s32.totalorder %s181, %s183
    %p190 = scmp.eq.s32.totalorder %s18, 1
    %p191 = por %p189, %p190
    %p192 = scmp.ne.s32.totalorder %s183, %s184
    %p193 = scmp.eq.s32.totalorder %s18, 0
    %p194 = por %p192, %p193
    %p195 = scmp.ne.s32.totalorder %s183, %s184
    %p196 = scmp.eq.s32.totalorder %s19, 1
    %p197 = por %p195, %p196
    %p199 = scmp.ne.s32.totalorder %s184, %s198
    %p200 = scmp.eq.s32.totalorder %s19, 0
    %p201 = por %p199, %p200
    %s202 = ssub.s32 %s20, %s32
    %s203 = ssub.s32 %s21, %s28
    %s204 = sor.u32 %s202, %s203
    %p205 = scmp.eq.s32.totalorder %s204, 0
    %s207 = sadd.s32 %s206, 1
    %s208 = scalar_select %p205, %s206, %s207
    %p211 = pneg %p205
    %p212 = scmp.eq.s32.totalorder %s13, 1
    %p213 = por %p211, %p212
    %p214 = scmp.ne.s32.totalorder %s206, %s209
    %p215 = scmp.eq.s32.totalorder %s13, 0
    %p216 = por %p214, %p215
    %p217 = scmp.ne.s32.totalorder %s206, %s209
    %p218 = scmp.eq.s32.totalorder %s18, 1
    %p219 = por %p217, %p218
    %p220 = scmp.ne.s32.totalorder %s209, %s210
    %p221 = scmp.eq.s32.totalorder %s18, 0
    %p222 = por %p220, %p221
    %p223 = scmp.ne.s32.totalorder %s209, %s210
    %p224 = scmp.eq.s32.totalorder %s19, 1
    %p225 = por %p223, %p224
    %p227 = scmp.ne.s32.totalorder %s210, %s226
    %p228 = scmp.eq.s32.totalorder %s19, 0
    %p229 = por %p227, %p228
    %p230 = scmp.le.s32.totalorder 1, %s13
    %p231 = scmp.lt.s32.totalorder %s13, 3
    %p232 = pnand %p230, %p231
    %p233 = pneg %p232
    // Predicated region
    $region9: #{tpu_custom_call.1} parent=5 // pred_check
      _
    $region10: #{tpu_custom_call.1} parent=5 // pred_check_branch
      %235 = sbr.rel (%p232) target = $region12
    $region11: #{tpu_custom_call.1} parent=5 // pred_region
      %s236 = ssub.s32 %s13, 1
      // Predicated region
      $region13: #{tpu_custom_call.1} parent=11 // pred_check
        %p237 = pneg %p152
      $region14: #{tpu_custom_call.1} parent=11 // pred_check_branch
        %239 = sbr.rel (%p237) target = $region16
      $region15: #{tpu_custom_call.1} parent=11 // pred_region
        _
      $region16: #{tpu_custom_call.1} parent=11 // pred_fallthru
        _
      // Predicated region
      $region17: #{tpu_custom_call.1} parent=11 // pred_check
        %p240 = pneg %p173
      $region18: #{tpu_custom_call.1} parent=11 // pred_check_branch
        %242 = sbr.rel (%p240) target = $region20
      $region19: #{tpu_custom_call.1} parent=11 // pred_region
        _
      $region20: #{tpu_custom_call.1} parent=11 // pred_fallthru
        _
      // Predicated region
      $region21: #{tpu_custom_call.1} parent=11 // pred_check
        %p243 = pneg %p194
      $region22: #{tpu_custom_call.1} parent=11 // pred_check_branch
        %245 = sbr.rel (%p243) target = $region24
      $region23: #{tpu_custom_call.1} parent=11 // pred_region
        _
      $region24: #{tpu_custom_call.1} parent=11 // pred_fallthru
        _
    $region12: #{tpu_custom_call.1} parent=5 // pred_fallthru
      _
    %p246 = scmp.lt.s32.totalorder %s13, 2
    // Predicated region
    $region25: #{tpu_custom_call.1} parent=5 // pred_check
      %p247 = pneg %p246
    $region26: #{tpu_custom_call.1} parent=5 // pred_check_branch
      %249 = sbr.rel (%p247) target = $region28
    $region27: #{tpu_custom_call.1} parent=5 // pred_region
      // Predicated region
      $region29: #{tpu_custom_call.1} parent=27 // pred_check
        %p250 = pneg %p47
      $region30: #{tpu_custom_call.1} parent=27 // pred_check_branch
        %252 = sbr.rel (%p250) target = $region32
      $region31: #{tpu_custom_call.1} parent=27 // pred_region
        %s253 = smul.u32 8, %s21
        %p254 = scmp.lt.s32.totalorder %s20, 1
        %s255 = scalar_select %p254, %s20, 1
        %p256 = scmp.lt.s32.totalorder %s253, 7
        %s257 = scalar_select %p256, %s253, 7
        %s258 = smul.addr %s255, 8
        %s259 = sadd.s32 %s257, %s258
        %s260 = smul.addr %s259, 8
        %s261 = scalar_lea.vmem %s0, %s260
        %s262 = smul.u32 8, %s21
      $region32: #{tpu_custom_call.1} parent=27 // pred_fallthru
        _
      // Predicated region
      $region33: #{tpu_custom_call.1} parent=27 // pred_check
        %p263 = pneg %p73
      $region34: #{tpu_custom_call.1} parent=27 // pred_check_branch
        %265 = sbr.rel (%p263) target = $region36
      $region35: #{tpu_custom_call.1} parent=27 // pred_region
        %p266 = scmp.lt.s32.totalorder %s20, 1
        %s267 = scalar_select %p266, %s20, 1
        %s268 = scalar_lea.vmem %s1, %s267
      $region36: #{tpu_custom_call.1} parent=27 // pred_fallthru
        _
      // Predicated region
      $region37: #{tpu_custom_call.1} parent=27 // pred_check
        %p269 = pneg %p99
      $region38: #{tpu_custom_call.1} parent=27 // pred_check_branch
        %271 = sbr.rel (%p269) target = $region40
      $region39: #{tpu_custom_call.1} parent=27 // pred_region
        %p272 = scmp.lt.s32.totalorder %s20, 1
        %s273 = scalar_select %p272, %s20, 1
        %s274 = scalar_lea.vmem %s2, %s273
      $region40: #{tpu_custom_call.1} parent=27 // pred_fallthru
        _
      // Predicated region
      $region41: #{tpu_custom_call.1} parent=27 // pred_check
        %p275 = pneg %p125
      $region42: #{tpu_custom_call.1} parent=27 // pred_check_branch
        %277 = sbr.rel (%p275) target = $region44
      $region43: #{tpu_custom_call.1} parent=27 // pred_region
        %p278 = scmp.lt.s32.totalorder %s20, 1
        %s279 = scalar_select %p278, %s20, 1
        %s280 = scalar_lea.vmem %s3, %s279
      $region44: #{tpu_custom_call.1} parent=27 // pred_fallthru
        _
    $region28: #{tpu_custom_call.1} parent=5 // pred_fallthru
      _
    %p281 = scmp.le.s32.totalorder 1, %s13
    %p282 = scmp.lt.s32.totalorder %s13, 3
    %p283 = pnand %p281, %p282
    %p284 = pneg %p283
    // Predicated region
    $region45: #{tpu_custom_call.1} parent=5 // pred_check
      _
    $region46: #{tpu_custom_call.1} parent=5 // pred_check_branch
      %286 = sbr.rel (%p283) target = $region48
    $region47: #{tpu_custom_call.1} parent=5 // pred_region
      %s287 = ssub.s32 %s13, 1
      %s288 = smul.u32 8, %s23
      %p289 = scmp.lt.s32.totalorder %s22, 1
      %s290 = scalar_select %p289, %s22, 1
      %p291 = scmp.lt.s32.totalorder %s288, 7
      %s292 = scalar_select %p291, %s288, 7
      %s293 = smul.addr %s290, 8
      %s294 = sadd.s32 %s292, %s293
      %s295 = smul.addr %s294, 8
      %s296 = scalar_lea.vmem %s0, %s295
      %p297 = pneg %p53
      %p298 = pneg %p50
      %p299 = scmp.lt.s32.totalorder %s22, 1
      %s300 = scalar_select %p299, %s22, 1
      %s301 = scalar_lea.vmem %s1, %s300
      %p302 = pneg %p79
      %p303 = pneg %p76
      %p304 = scmp.lt.s32.totalorder %s22, 1
      %s305 = scalar_select %p304, %s22, 1
      %s306 = scalar_lea.vmem %s2, %s305
      %p307 = pneg %p105
      %p308 = pneg %p102
      %p309 = scmp.lt.s32.totalorder %s22, 1
      %s310 = scalar_select %p309, %s22, 1
      %s311 = scalar_lea.vmem %s3, %s310
      %p312 = pneg %p131
      %p313 = pneg %p128
      %p314 = pneg %p152
      %p315 = pneg %p149
      %p316 = pneg %p173
      %p317 = pneg %p170
      %p318 = pneg %p194
      %p319 = pneg %p191
      %p320 = pneg %p222
      %p321 = pneg %p219
      %s322 = smul.u32 8, %s23
      %p323 = scmp.lt.s32.totalorder %s22, 1
      %s324 = scalar_select %p323, %s22, 1
      %p325 = scmp.lt.s32.totalorder %s322, 7
      %s326 = scalar_select %p325, %s322, 7
      %s327 = smul.addr %s324, 8
      %s328 = sadd.s32 %s326, %s327
      %s329 = smul.addr %s328, 8
      %s330 = scalar_lea.vmem %s7, %s329
      %s331 = smul.u32 8, %s23
      %p332 = scmp.lt.s32.totalorder %s22, 1
      %s333 = scalar_select %p332, %s22, 1
      %p334 = scmp.lt.s32.totalorder %s331, 7
      %s335 = scalar_select %p334, %s331, 7
      %s336 = smul.addr %s333, 8
      %s337 = sadd.s32 %s335, %s336
      %s338 = smul.addr %s337, 8
      %s339 = scalar_lea.vmem %s0, %s338
      %s340 = smul.u32 8, %s23
      %p341 = scmp.lt.s32.totalorder %s22, 1
      %s342 = scalar_select %p341, %s22, 1
      %s343 = scalar_lea.vmem %s1, %s342
      %p344 = scmp.lt.s32.totalorder %s22, 1
      %s345 = scalar_select %p344, %s22, 1
      %s346 = scalar_lea.vmem %s2, %s345
      %p347 = scmp.lt.s32.totalorder %s22, 1
      %s348 = scalar_select %p347, %s22, 1
      %s349 = scalar_lea.vmem %s3, %s348
      %s350 = smul.u32 8, %s23
      %p351 = scmp.lt.s32.totalorder %s22, 1
      %s352 = scalar_select %p351, %s22, 1
      %p353 = scmp.lt.s32.totalorder %s350, 7
      %s354 = scalar_select %p353, %s350, 7
      %s355 = smul.addr %s352, 8
      %s356 = sadd.s32 %s354, %s355
      %s357 = smul.addr %s356, 8
      %s358 = scalar_lea.vmem %s7, %s357
      %s359 = smul.u32 8, %s23
      %v360 = vld [vmem:[%s339] sm:$0xff]
      %v361 = vld [vmem:[%s339 + $0x8] sm:$0xff]
      %v362 = vld [vmem:[%s339 + $0x10] sm:$0xff]
      %v363 = vld [vmem:[%s339 + $0x18] sm:$0xff]
      %v364 = vld [vmem:[%s339 + $0x20] sm:$0xff]
      %v365 = vld [vmem:[%s339 + $0x28] sm:$0xff]
      %v366 = vld [vmem:[%s339 + $0x30] sm:$0xff]
      %v367 = vld [vmem:[%s339 + $0x38] sm:$0xff]
      %v368 = vld [vmem:[%s4] sm:$0xff]
      %v369 = vld [vmem:[%s4 + $0x8] sm:$0xff]
      %v370 = vld [vmem:[%s4 + $0x10] sm:$0xff]
      %v371 = vld [vmem:[%s4 + $0x18] sm:$0xff]
      %v372 = vld [vmem:[%s343] sm:$0x1]
      %v374 = vlaneseq
      %v375 = vshrl.u32 %v374, 7
      %v376 = vsub.s32 0, %v375
      %v377 = vrot.slane %v372, %v376
      %vm379 = vcmask 261120
      %v381 = vsel %vm379, %v360, 0
      %v384 = vsel %vm379, %v361, 0
      %v387 = vsel %vm379, %v362, 0
      %v390 = vsel %vm379, %v363, 0
      %v393 = vsel %vm379, %v364, 0
      %v396 = vsel %vm379, %v365, 0
      %v399 = vsel %vm379, %v366, 0
      %v402 = vsel %vm379, %v367, 0
      %404 = vmatprep.subr.mxu0 0.0
      %405 = vmatpush1.msra.mxu0 0.0
      %406 = vmatprep.subr.mxu0 0.0
      %407 = vmatpush1.msra.mxu0 0.0
      %408 = vmatprep.subr.mxu0 0.0
      %409 = vmatpush1.msra.mxu0 0.0
      %410 = vmatprep.subr.mxu0 0.0
      %411 = vmatpush1.msra.mxu0 0.0
      %412 = vmatprep.subr.mxu0 0.0
      %413 = vmatpush1.msra.mxu0 0.0
      %414 = vmatprep.subr.mxu0 0.0
      %415 = vmatpush1.msra.mxu0 0.0
      %416 = vmatprep.subr.mxu0 0.0
      %417 = vmatpush1.msra.mxu0 0.0
      %418 = vmatprep.subr.mxu0 0.0
      %419 = vmatpush1.msra.mxu0 0.0
      %420 = vmatprep.subr.mxu0 0.0
      %421 = vmatpush1.msra.mxu0 0.0
      %422 = vmatprep.subr.mxu0 0.0
      %423 = vmatpush1.msra.mxu0 0.0
      %424 = vmatprep.subr.mxu0 0.0
      %425 = vmatpush1.msra.mxu0 0.0
      %426 = vmatprep.subr.mxu0 0.0
      %427 = vmatpush1.msra.mxu0 0.0
      %428 = vmatprep.subr.mxu0 0.0
      %429 = vmatpush1.msra.mxu0 %v371
      %430 = vmatprep.subr.mxu0 0.0
      %431 = vmatpush1.msra.mxu0 %v370
      %432 = vmatprep.subr.mxu0 0.0
      %433 = vmatpush1.msra.mxu0 %v369
      %434 = vmatprep.subr.mxu0 0.0
      %435 = vmatpush1.msra.mxu0 %v368
      %436 = vmatprep.subr.mxu0 0.0
      %437 = vmatpush2.msra.mxu0 0.0
      %438 = vmatprep.subr.mxu0 0.0
      %439 = vmatpush2.msra.mxu0 0.0
      %440 = vmatprep.subr.mxu0 0.0
      %441 = vmatpush2.msra.mxu0 0.0
      %442 = vmatprep.subr.mxu0 0.0
      %443 = vmatpush2.msra.mxu0 0.0
      %444 = vmatprep.subr.mxu0 0.0
      %445 = vmatpush2.msra.mxu0 0.0
      %446 = vmatprep.subr.mxu0 0.0
      %447 = vmatpush2.msra.mxu0 0.0
      %448 = vmatprep.subr.mxu0 0.0
      %449 = vmatpush2.msra.mxu0 0.0
      %450 = vmatprep.subr.mxu0 0.0
      %451 = vmatpush2.msra.mxu0 0.0
      %452 = vmatprep.subr.mxu0 0.0
      %453 = vmatpush2.msra.mxu0 0.0
      %454 = vmatprep.subr.mxu0 0.0
      %455 = vmatpush2.msra.mxu0 0.0
      %456 = vmatprep.subr.mxu0 0.0
      %457 = vmatpush2.msra.mxu0 0.0
      %458 = vmatprep.subr.mxu0 0.0
      %459 = vmatpush2.msra.mxu0 0.0
      %460 = vmatprep.subr.mxu0 0.0
      %461 = vmatpush2.msra.mxu0 0.0
      %462 = vmatprep.subr.mxu0 0.0
      %463 = vmatpush2.msra.mxu0 0.0
      %464 = vmatprep.subr.mxu0 0.0
      %465 = vmatpush2.msra.mxu0 0.0
      %466 = vmatprep.subr.mxu0 0.0
      %467 = vmatpush2.msra.mxu0 0.0
      %468 = vmatprep.mubr.f32.mxu0 0.0
      %469 = vmatmul.mubr.f32.gmra.mxu0 %v381
      %v470 = vpop.f32.mrf.mxu0
      %v471 = vadd.f32 %v377, %v470
      %v472 = vpop.f32.mrf.mxu0
      %473 = vmatprep.mubr.f32.mxu0 0.0
      %474 = vmatmul.mubr.f32.gmra.mxu0 %v384
      %v475 = vpop.f32.mrf.mxu0
      %v476 = vadd.f32 %v377, %v475
      %v477 = vpop.f32.mrf.mxu0
      %478 = vmatprep.mubr.f32.mxu0 0.0
      %479 = vmatmul.mubr.f32.gmra.mxu0 %v387
      %v480 = vpop.f32.mrf.mxu0
      %v481 = vadd.f32 %v377, %v480
      %v482 = vpop.f32.mrf.mxu0
      %483 = vmatprep.mubr.f32.mxu0 0.0
      %484 = vmatmul.mubr.f32.gmra.mxu0 %v390
      %v485 = vpop.f32.mrf.mxu0
      %v486 = vadd.f32 %v377, %v485
      %v487 = vpop.f32.mrf.mxu0
      %488 = vmatprep.mubr.f32.mxu0 0.0
      %489 = vmatmul.mubr.f32.gmra.mxu0 %v393
      %v490 = vpop.f32.mrf.mxu0
      %v491 = vadd.f32 %v377, %v490
      %v492 = vpop.f32.mrf.mxu0
      %493 = vmatprep.mubr.f32.mxu0 0.0
      %494 = vmatmul.mubr.f32.gmra.mxu0 %v396
      %v495 = vpop.f32.mrf.mxu0
      %v496 = vadd.f32 %v377, %v495
      %v497 = vpop.f32.mrf.mxu0
      %498 = vmatprep.mubr.f32.mxu0 0.0
      %499 = vmatmul.mubr.f32.gmra.mxu0 %v399
      %v500 = vpop.f32.mrf.mxu0
      %v501 = vadd.f32 %v377, %v500
      %v502 = vpop.f32.mrf.mxu0
      %503 = vmatprep.mubr.f32.mxu0 0.0
      %504 = vmatmul.mubr.f32.gmra.mxu0 %v402
      %v505 = vpop.f32.mrf.mxu0
      %v506 = vadd.f32 %v377, %v505
      %v507 = vpop.f32.mrf.mxu0
      %508 = vdwg.mxu0
      %v509 = vmax.f32 %v471, 0.0
      %v510 = vmax.f32 %v476, 0.0
      %v511 = vmax.f32 %v481, 0.0
      %v512 = vmax.f32 %v486, 0.0
      %v513 = vmax.f32 %v491, 0.0
      %v514 = vmax.f32 %v496, 0.0
      %v515 = vmax.f32 %v501, 0.0
      %v516 = vmax.f32 %v506, 0.0
      %v517 = vld [vmem:[%s5] sm:$0xff]
      %v518 = vld [vmem:[%s5 + $0x8] sm:$0xff]
      %v519 = vld [vmem:[%s5 + $0x10] sm:$0xff]
      %v520 = vld [vmem:[%s5 + $0x18] sm:$0xff]
      %v521 = vld [vmem:[%s5 + $0x20] sm:$0xff]
      %v522 = vld [vmem:[%s5 + $0x28] sm:$0xff]
      %v523 = vld [vmem:[%s5 + $0x30] sm:$0xff]
      %v524 = vld [vmem:[%s5 + $0x38] sm:$0xff]
      %v525 = vld [vmem:[%s346] sm:$0x1]
      %v527 = vlaneseq
      %v528 = vshrl.u32 %v527, 7
      %v529 = vsub.s32 0, %v528
      %v530 = vrot.slane %v525, %v529
      %vm532 = vcmask 523264
      %v534 = vsel %vm532, %v509, 0
      %v537 = vsel %vm532, %v510, 0
      %v540 = vsel %vm532, %v511, 0
      %v543 = vsel %vm532, %v512, 0
      %v546 = vsel %vm532, %v513, 0
      %v549 = vsel %vm532, %v514, 0
      %v552 = vsel %vm532, %v515, 0
      %v555 = vsel %vm532, %v516, 0
      %557 = vmatprep.subr.mxu0 0.0
      %558 = vmatpush1.msra.mxu0 0.0
      %559 = vmatprep.subr.mxu0 0.0
      %560 = vmatpush1.msra.mxu0 0.0
      %561 = vmatprep.subr.mxu0 0.0
      %562 = vmatpush1.msra.mxu0 0.0
      %563 = vmatprep.subr.mxu0 0.0
      %564 = vmatpush1.msra.mxu0 0.0
      %565 = vmatprep.subr.mxu0 0.0
      %566 = vmatpush1.msra.mxu0 0.0
      %567 = vmatprep.subr.mxu0 0.0
      %568 = vmatpush1.msra.mxu0 0.0
      %569 = vmatprep.subr.mxu0 0.0
      %570 = vmatpush1.msra.mxu0 0.0
      %571 = vmatprep.subr.mxu0 0.0
      %572 = vmatpush1.msra.mxu0 0.0
      %573 = vmatprep.subr.mxu0 0.0
      %574 = vmatpush1.msra.mxu0 %v524
      %575 = vmatprep.subr.mxu0 0.0
      %576 = vmatpush1.msra.mxu0 %v523
      %577 = vmatprep.subr.mxu0 0.0
      %578 = vmatpush1.msra.mxu0 %v522
      %579 = vmatprep.subr.mxu0 0.0
      %580 = vmatpush1.msra.mxu0 %v521
      %581 = vmatprep.subr.mxu0 0.0
      %582 = vmatpush1.msra.mxu0 %v520
      %583 = vmatprep.subr.mxu0 0.0
      %584 = vmatpush1.msra.mxu0 %v519
      %585 = vmatprep.subr.mxu0 0.0
      %586 = vmatpush1.msra.mxu0 %v518
      %587 = vmatprep.subr.mxu0 0.0
      %588 = vmatpush1.msra.mxu0 %v517
      %589 = vmatprep.subr.mxu0 0.0
      %590 = vmatpush2.msra.mxu0 0.0
      %591 = vmatprep.subr.mxu0 0.0
      %592 = vmatpush2.msra.mxu0 0.0
      %593 = vmatprep.subr.mxu0 0.0
      %594 = vmatpush2.msra.mxu0 0.0
      %595 = vmatprep.subr.mxu0 0.0
      %596 = vmatpush2.msra.mxu0 0.0
      %597 = vmatprep.subr.mxu0 0.0
      %598 = vmatpush2.msra.mxu0 0.0
      %599 = vmatprep.subr.mxu0 0.0
      %600 = vmatpush2.msra.mxu0 0.0
      %601 = vmatprep.subr.mxu0 0.0
      %602 = vmatpush2.msra.mxu0 0.0
      %603 = vmatprep.subr.mxu0 0.0
      %604 = vmatpush2.msra.mxu0 0.0
      %605 = vmatprep.subr.mxu0 0.0
      %606 = vmatpush2.msra.mxu0 0.0
      %607 = vmatprep.subr.mxu0 0.0
      %608 = vmatpush2.msra.mxu0 0.0
      %609 = vmatprep.subr.mxu0 0.0
      %610 = vmatpush2.msra.mxu0 0.0
      %611 = vmatprep.subr.mxu0 0.0
      %612 = vmatpush2.msra.mxu0 0.0
      %613 = vmatprep.subr.mxu0 0.0
      %614 = vmatpush2.msra.mxu0 0.0
      %615 = vmatprep.subr.mxu0 0.0
      %616 = vmatpush2.msra.mxu0 0.0
      %617 = vmatprep.subr.mxu0 0.0
      %618 = vmatpush2.msra.mxu0 0.0
      %619 = vmatprep.subr.mxu0 0.0
      %620 = vmatpush2.msra.mxu0 0.0
      %621 = vmatprep.mubr.f32.mxu0 0.0
      %622 = vmatmul.mubr.f32.gmra.mxu0 %v534
      %v623 = vpop.f32.mrf.mxu0
      %v624 = vadd.f32 %v530, %v623
      %v625 = vpop.f32.mrf.mxu0
      %626 = vmatprep.mubr.f32.mxu0 0.0
      %627 = vmatmul.mubr.f32.gmra.mxu0 %v537
      %v628 = vpop.f32.mrf.mxu0
      %v629 = vadd.f32 %v530, %v628
      %v630 = vpop.f32.mrf.mxu0
      %631 = vmatprep.mubr.f32.mxu0 0.0
      %632 = vmatmul.mubr.f32.gmra.mxu0 %v540
      %v633 = vpop.f32.mrf.mxu0
      %v634 = vadd.f32 %v530, %v633
      %v635 = vpop.f32.mrf.mxu0
      %636 = vmatprep.mubr.f32.mxu0 0.0
      %637 = vmatmul.mubr.f32.gmra.mxu0 %v543
      %v638 = vpop.f32.mrf.mxu0
      %v639 = vadd.f32 %v530, %v638
      %v640 = vpop.f32.mrf.mxu0
      %641 = vmatprep.mubr.f32.mxu0 0.0
      %642 = vmatmul.mubr.f32.gmra.mxu0 %v546
      %v643 = vpop.f32.mrf.mxu0
      %v644 = vadd.f32 %v530, %v643
      %v645 = vpop.f32.mrf.mxu0
      %646 = vmatprep.mubr.f32.mxu0 0.0
      %647 = vmatmul.mubr.f32.gmra.mxu0 %v549
      %v648 = vpop.f32.mrf.mxu0
      %v649 = vadd.f32 %v530, %v648
      %v650 = vpop.f32.mrf.mxu0
      %651 = vmatprep.mubr.f32.mxu0 0.0
      %652 = vmatmul.mubr.f32.gmra.mxu0 %v552
      %v653 = vpop.f32.mrf.mxu0
      %v654 = vadd.f32 %v530, %v653
      %v655 = vpop.f32.mrf.mxu0
      %656 = vmatprep.mubr.f32.mxu0 0.0
      %657 = vmatmul.mubr.f32.gmra.mxu0 %v555
      %v658 = vpop.f32.mrf.mxu0
      %v659 = vadd.f32 %v530, %v658
      %v660 = vpop.f32.mrf.mxu0
      %661 = vdwg.mxu0
      %v662 = vmax.f32 %v624, 0.0
      %v663 = vmax.f32 %v629, 0.0
      %v664 = vmax.f32 %v634, 0.0
      %v665 = vmax.f32 %v639, 0.0
      %v666 = vmax.f32 %v644, 0.0
      %v667 = vmax.f32 %v649, 0.0
      %v668 = vmax.f32 %v654, 0.0
      %v669 = vmax.f32 %v659, 0.0
      %v670 = vld [vmem:[%s6] sm:$0xff]
      %v671 = vld [vmem:[%s6 + $0x8] sm:$0xff]
      %v672 = vld [vmem:[%s6 + $0x10] sm:$0xff]
      %v673 = vld [vmem:[%s6 + $0x18] sm:$0xff]
      %v674 = vld [vmem:[%s6 + $0x20] sm:$0xff]
      %v675 = vld [vmem:[%s6 + $0x28] sm:$0xff]
      %v676 = vld [vmem:[%s6 + $0x30] sm:$0xff]
      %v677 = vld [vmem:[%s6 + $0x38] sm:$0xff]
      %v678 = vld [vmem:[%s349] sm:$0x1]
      %v680 = vlaneseq
      %v681 = vshrl.u32 %v680, 7
      %v682 = vsub.s32 0, %v681
      %v683 = vrot.slane %v678, %v682
      %v686 = vsel %vm532, %v662, 0
      %v689 = vsel %vm532, %v663, 0
      %v692 = vsel %vm532, %v664, 0
      %v695 = vsel %vm532, %v665, 0
      %v698 = vsel %vm532, %v666, 0
      %v701 = vsel %vm532, %v667, 0
      %v704 = vsel %vm532, %v668, 0
      %v707 = vsel %vm532, %v669, 0
      %709 = vmatprep.subr.mxu0 0.0
      %710 = vmatpush1.msra.mxu0 0.0
      %711 = vmatprep.subr.mxu0 0.0
      %712 = vmatpush1.msra.mxu0 0.0
      %713 = vmatprep.subr.mxu0 0.0
      %714 = vmatpush1.msra.mxu0 0.0
      %715 = vmatprep.subr.mxu0 0.0
      %716 = vmatpush1.msra.mxu0 0.0
      %717 = vmatprep.subr.mxu0 0.0
      %718 = vmatpush1.msra.mxu0 0.0
      %719 = vmatprep.subr.mxu0 0.0
      %720 = vmatpush1.msra.mxu0 0.0
      %721 = vmatprep.subr.mxu0 0.0
      %722 = vmatpush1.msra.mxu0 0.0
      %723 = vmatprep.subr.mxu0 0.0
      %724 = vmatpush1.msra.mxu0 0.0
      %725 = vmatprep.subr.mxu0 0.0
      %726 = vmatpush1.msra.mxu0 %v677
      %727 = vmatprep.subr.mxu0 0.0
      %728 = vmatpush1.msra.mxu0 %v676
      %729 = vmatprep.subr.mxu0 0.0
      %730 = vmatpush1.msra.mxu0 %v675
      %731 = vmatprep.subr.mxu0 0.0
      %732 = vmatpush1.msra.mxu0 %v674
      %733 = vmatprep.subr.mxu0 0.0
      %734 = vmatpush1.msra.mxu0 %v673
      %735 = vmatprep.subr.mxu0 0.0
      %736 = vmatpush1.msra.mxu0 %v672
      %737 = vmatprep.subr.mxu0 0.0
      %738 = vmatpush1.msra.mxu0 %v671
      %739 = vmatprep.subr.mxu0 0.0
      %740 = vmatpush1.msra.mxu0 %v670
      %741 = vmatprep.subr.mxu0 0.0
      %742 = vmatpush2.msra.mxu0 0.0
      %743 = vmatprep.subr.mxu0 0.0
      %744 = vmatpush2.msra.mxu0 0.0
      %745 = vmatprep.subr.mxu0 0.0
      %746 = vmatpush2.msra.mxu0 0.0
      %747 = vmatprep.subr.mxu0 0.0
      %748 = vmatpush2.msra.mxu0 0.0
      %749 = vmatprep.subr.mxu0 0.0
      %750 = vmatpush2.msra.mxu0 0.0
      %751 = vmatprep.subr.mxu0 0.0
      %752 = vmatpush2.msra.mxu0 0.0
      %753 = vmatprep.subr.mxu0 0.0
      %754 = vmatpush2.msra.mxu0 0.0
      %755 = vmatprep.subr.mxu0 0.0
      %756 = vmatpush2.msra.mxu0 0.0
      %757 = vmatprep.subr.mxu0 0.0
      %758 = vmatpush2.msra.mxu0 0.0
      %759 = vmatprep.subr.mxu0 0.0
      %760 = vmatpush2.msra.mxu0 0.0
      %761 = vmatprep.subr.mxu0 0.0
      %762 = vmatpush2.msra.mxu0 0.0
      %763 = vmatprep.subr.mxu0 0.0
      %764 = vmatpush2.msra.mxu0 0.0
      %765 = vmatprep.subr.mxu0 0.0
      %766 = vmatpush2.msra.mxu0 0.0
      %767 = vmatprep.subr.mxu0 0.0
      %768 = vmatpush2.msra.mxu0 0.0
      %769 = vmatprep.subr.mxu0 0.0
      %770 = vmatpush2.msra.mxu0 0.0
      %771 = vmatprep.subr.mxu0 0.0
      %772 = vmatpush2.msra.mxu0 0.0
      %773 = vmatprep.mubr.f32.mxu0 0.0
      %774 = vmatmul.mubr.f32.gmra.mxu0 %v686
      %v775 = vpop.f32.mrf.mxu0
      %v776 = vadd.f32 %v683, %v775
      %v777 = vpop.f32.mrf.mxu0
      %778 = vmatprep.mubr.f32.mxu0 0.0
      %779 = vmatmul.mubr.f32.gmra.mxu0 %v689
      %v780 = vpop.f32.mrf.mxu0
      %v781 = vadd.f32 %v683, %v780
      %v782 = vpop.f32.mrf.mxu0
      %783 = vmatprep.mubr.f32.mxu0 0.0
      %784 = vmatmul.mubr.f32.gmra.mxu0 %v692
      %v785 = vpop.f32.mrf.mxu0
      %v786 = vadd.f32 %v683, %v785
      %v787 = vpop.f32.mrf.mxu0
      %788 = vmatprep.mubr.f32.mxu0 0.0
      %789 = vmatmul.mubr.f32.gmra.mxu0 %v695
      %v790 = vpop.f32.mrf.mxu0
      %v791 = vadd.f32 %v683, %v790
      %v792 = vpop.f32.mrf.mxu0
      %793 = vmatprep.mubr.f32.mxu0 0.0
      %794 = vmatmul.mubr.f32.gmra.mxu0 %v698
      %v795 = vpop.f32.mrf.mxu0
      %v796 = vadd.f32 %v683, %v795
      %v797 = vpop.f32.mrf.mxu0
      %798 = vmatprep.mubr.f32.mxu0 0.0
      %799 = vmatmul.mubr.f32.gmra.mxu0 %v701
      %v800 = vpop.f32.mrf.mxu0
      %v801 = vadd.f32 %v683, %v800
      %v802 = vpop.f32.mrf.mxu0
      %803 = vmatprep.mubr.f32.mxu0 0.0
      %804 = vmatmul.mubr.f32.gmra.mxu0 %v704
      %v805 = vpop.f32.mrf.mxu0
      %v806 = vadd.f32 %v683, %v805
      %v807 = vpop.f32.mrf.mxu0
      %808 = vmatprep.mubr.f32.mxu0 0.0
      %809 = vmatmul.mubr.f32.gmra.mxu0 %v707
      %v810 = vpop.f32.mrf.mxu0
      %v811 = vadd.f32 %v683, %v810
      %v812 = vpop.f32.mrf.mxu0
      %813 = vdwg.mxu0
      %v814 = vadd.f32 %v776, %v360
      %v815 = vadd.f32 %v781, %v361
      %v816 = vadd.f32 %v786, %v362
      %v817 = vadd.f32 %v791, %v363
      %v818 = vadd.f32 %v796, %v364
      %v819 = vadd.f32 %v801, %v365
      %v820 = vadd.f32 %v806, %v366
      %v821 = vadd.f32 %v811, %v367
      %822 = vst.msk [vmem:[%s358] sm:$0xff] %vm379, %v814
      %823 = vst.msk [vmem:[%s358 + $0x8] sm:$0xff] %vm379, %v815
      %824 = vst.msk [vmem:[%s358 + $0x10] sm:$0xff] %vm379, %v816
      %825 = vst.msk [vmem:[%s358 + $0x18] sm:$0xff] %vm379, %v817
      %826 = vst.msk [vmem:[%s358 + $0x20] sm:$0xff] %vm379, %v818
      %827 = vst.msk [vmem:[%s358 + $0x28] sm:$0xff] %vm379, %v819
      %828 = vst.msk [vmem:[%s358 + $0x30] sm:$0xff] %vm379, %v820
      %829 = vst.msk [vmem:[%s358 + $0x38] sm:$0xff] %vm379, %v821
      %s830 = smul.u32 8, %s23
      %p831 = scmp.lt.s32.totalorder %s22, 1
      %s832 = scalar_select %p831, %s22, 1
      %p833 = scmp.lt.s32.totalorder %s830, 7
      %s834 = scalar_select %p833, %s830, 7
      %s835 = smul.addr %s832, 8
      %s836 = sadd.s32 %s834, %s835
      %s837 = smul.addr %s836, 8
      %s838 = scalar_lea.vmem %s7, %s837
      // Predicated region
      $region49: #{tpu_custom_call.1} parent=47 // pred_check
        %p839 = pneg %p219
      $region50: #{tpu_custom_call.1} parent=47 // pred_check_branch
        %841 = sbr.rel (%p839) target = $region52
      $region51: #{tpu_custom_call.1} parent=47 // pred_region
        %s842 = smul.u32 8, %s23
      $region52: #{tpu_custom_call.1} parent=47 // pred_fallthru
        _
    $region48: #{tpu_custom_call.1} parent=5 // pred_fallthru
      _
    %p843 = scmp.le.s32.totalorder 2, %s13
    // Predicated region
    $region53: #{tpu_custom_call.1} parent=5 // pred_check
      %p844 = pneg %p843
    $region54: #{tpu_custom_call.1} parent=5 // pred_check_branch
      %846 = sbr.rel (%p844) target = $region56
    $region55: #{tpu_custom_call.1} parent=5 // pred_region
      %s847 = ssub.s32 %s13, 2
      // Predicated region
      $region57: #{tpu_custom_call.1} parent=55 // pred_check
        %p848 = pneg %p225
      $region58: #{tpu_custom_call.1} parent=55 // pred_check_branch
        %850 = sbr.rel (%p848) target = $region60
      $region59: #{tpu_custom_call.1} parent=55 // pred_region
        %s851 = smul.u32 8, %s25
        %p852 = scmp.lt.s32.totalorder %s24, 1
        %s853 = scalar_select %p852, %s24, 1
        %p854 = scmp.lt.s32.totalorder %s851, 7
        %s855 = scalar_select %p854, %s851, 7
        %s856 = smul.addr %s853, 8
        %s857 = sadd.s32 %s855, %s856
        %s858 = smul.addr %s857, 8
        %s859 = scalar_lea.vmem %s7, %s858
      $region60: #{tpu_custom_call.1} parent=55 // pred_fallthru
        _
    $region56: #{tpu_custom_call.1} parent=5 // pred_fallthru
      _
  $region6: #{tpu_custom_call.1} parent=0 // loop_footer
    %s17 = sadd.s32 1, %s13
  $region7: #{tpu_custom_call.1} parent=0 // loop_footer_branch
    %12 = sbr.rel target = $region3
  $region8: #{tpu_custom_call.1} parent=0 // loop_exit
    _

</llo_original>
